<compile_context>
chip_gen: v7x
topology: tpu7x:2x2x1
jax: 0.10.0
libtpu: 0.0.40
codegen_flags: <defaults>
</compile_context>

<pallas_src>
import functools

import jax
import jax.numpy as jnp
from jax.experimental import pallas as pl
from jax.experimental.pallas import tpu as pltpu


def _round_up(x: int, m: int) -> int:
    return ((x + m - 1) // m) * m


def _constraint_dyn_emb_kernel(reasons_ref, w_ref, gk_ref, gv_ref, lk_ref):
    # reasons_ref: [TM, K]        bf16/f32  multi-hot reasons (+ ones col, zero pad)
    # w_ref:       [3, K, E_pad]  f32       prefused: 2**r * W chunk (lane padded)
    # gk/gv/lk:    [TM, E_pad]    out dtype
    a = reasons_ref[...].astype(jnp.float32)
    for j, o_ref in enumerate((gk_ref, gv_ref, lk_ref)):
        o_ref[...] = jnp.dot(
            a, w_ref[j], preferred_element_type=jnp.float32
        ).astype(o_ref.dtype)


@functools.partial(jax.jit, static_argnums=(2, 4),
                   static_argnames=("embed_dim", "out_dtype"))
def constraint_dynamic_embedding(masking_reasons, weight, embed_dim, bias=None,
                                 out_dtype=jnp.bfloat16):
    """masking_reasons: [B, N, R] bool/int/float; weight: [3E, 1]; bias: [3E] or None."""
    B, N, R = masking_reasons.shape
    rows = B * N
    e_pad = _round_up(embed_dim, 128)             # each chunk lane-dense (unmasked vst)
    out_bytes = jnp.dtype(out_dtype).itemsize

    # ---- reasons input ------------------------------------------------------
    reasons2d = masking_reasons.reshape(rows, R)
    if jnp.issubdtype(reasons2d.dtype, jnp.floating) and reasons2d.dtype != jnp.bfloat16:
        reasons2d = reasons2d.astype(jnp.float32)   # soft masks: keep full precision
    else:
        reasons2d = reasons2d.astype(jnp.bfloat16)  # bool/int: exact, half read bytes
    r_bytes = reasons2d.dtype.itemsize

    # ---- fused weight: fold bit-pack + Linear into one matmul ---------------
    # out_chunk_j = reasons @ (2**r * W_j)   (+ bias_j via an always-on column)
    powers = 2.0 ** jnp.arange(R, dtype=jnp.float32)                  # [R]
    w3 = weight.reshape(3, embed_dim).astype(jnp.float32)             # [3, E]
    w3 = jnp.pad(w3, ((0, 0), (0, e_pad - embed_dim)))                # [3, E_pad]
    fused_w = powers[None, :, None] * w3[:, None, :]                  # [3, R, E_pad]
    k_real = R
    if bias is not None:
        b3 = jnp.pad(bias.reshape(3, embed_dim).astype(jnp.float32),
                     ((0, 0), (0, e_pad - embed_dim)))                # [3, E_pad]
        fused_w = jnp.concatenate([fused_w, b3[:, None, :]], axis=1)  # [3, R+1, E_pad]
        reasons2d = jnp.concatenate(
            [reasons2d, jnp.ones((rows, 1), reasons2d.dtype)], axis=1)
        k_real = R + 1
    k_dim = _round_up(k_real, 8)
    if k_dim != k_real:
        fused_w = jnp.pad(fused_w, ((0, 0), (0, k_dim - k_real), (0, 0)))

    # ---- tile size (HBM-write bound) ----------------------------------------
    # Each pipeline step should move a few MiB of output (amortizes ~0.35 us/step,
    # matters most at v7x's 3.2 TB/s), but keep >= ~8 grid blocks so row padding
    # wastes little and the "parallel" axis splits across v7x's two TensorCores.
    per_row_vmem = (2 * 3 * e_pad * out_bytes      # 3 outputs, double-buffered
                    + 2 * 128 * r_bytes            # reasons tile (lane-padded), 2 bufs
                    + e_pad * 4)                   # f32 matmul result before cast
    tm = (12 << 20) // per_row_vmem                # ~12 MiB per-step VMEM budget
    tm = min(tm, pl.cdiv(rows, 8))
    tm = max(16, _round_up(min(tm, rows), 16))     # bf16 sublane packing
    tm = min(tm, _round_up(rows, 16))
    rows_pad = _round_up(rows, tm)
    grid = (rows_pad // tm,)

    pad_cols = k_dim - reasons2d.shape[1]
    if rows_pad != rows or pad_cols:
        reasons2d = jnp.pad(reasons2d, ((0, rows_pad - rows), (0, pad_cols)))

    # Explicit VMEM limit (v5e scoped default is 16 MiB, v6e/v7x 32 MiB).
    footprint = (2 * tm * 128 * r_bytes
                 + 2 * 3 * _round_up(k_dim, 8) * e_pad * 4
                 + 2 * 3 * tm * e_pad * out_bytes
                 + tm * e_pad * 4)
    vmem_limit = int(min(32 << 20, max(8 << 20, footprint * 3 // 2)))

    out_sds = jax.ShapeDtypeStruct((rows_pad, e_pad), out_dtype)
    row_spec = pl.BlockSpec((tm, k_dim), lambda i: (i, 0))
    w_spec = pl.BlockSpec((3, k_dim, e_pad), lambda i: (0, 0, 0))
    out_spec = pl.BlockSpec((tm, e_pad), lambda i: (i, 0))

    gk, gv, lk = pl.pallas_call(
        _constraint_dyn_emb_kernel,
        out_shape=(out_sds, out_sds, out_sds),
        grid_spec=pl.GridSpec(
            grid=grid,
            in_specs=[row_spec, w_spec],
            out_specs=(out_spec, out_spec, out_spec),
        ),
        compiler_params=pltpu.CompilerParams(
            dimension_semantics=("parallel",),
            vmem_limit_bytes=vmem_limit,
        ),
    )(reasons2d, fused_w)

    def _finish(o):
        # Slices only materialize when padding exists; otherwise reshape is free.
        if rows_pad != rows or e_pad != embed_dim:
            o = o[:rows, :embed_dim]
        return o.reshape(B, N, embed_dim)

    return _finish(gk), _finish(gv), _finish(lk)


def _reference(masking_reasons, weight, bias, embed_dim):
    """Pure-JAX reference mirroring the PyTorch forward (bit-pack encoding)."""
    R = masking_reasons.shape[-1]
    powers = 2.0 ** jnp.arange(R, dtype=jnp.float32)
    code = jnp.sum(masking_reasons.astype(jnp.float32) * powers, axis=-1,
                   keepdims=True)                                    # [B, N, 1]
    emb = code @ weight.astype(jnp.float32).T                        # [B, N, 3E]
    if bias is not None:
        emb = emb + bias.astype(jnp.float32)
    return jnp.split(emb, 3, axis=-1)


if __name__ == "__main__":
    B, N, R, E = 2, 16, 8, 32  # batch, nodes, num masking reasons, embed_dim

    key = jax.random.PRNGKey(0)
    k_reasons, k_w, k_b = jax.random.split(key, 3)

    # td['masking_reasons']: multi-hot boolean reasons per node
    masking_reasons = jax.random.bernoulli(k_reasons, p=0.3, shape=(B, N, R))

    # nn.Linear(1, 3E, bias=False): weight [3E, 1]; torch init U(-1, 1) for in=1.
    weight = jax.random.uniform(k_w, (3 * E, 1), jnp.float32, -1.0, 1.0)
    bias = jax.random.uniform(k_b, (3 * E,), jnp.float32, -1.0, 1.0)

    # Production path: bf16 output, no bias (module default linear_bias=False).
    gk, gv, lk = constraint_dynamic_embedding(masking_reasons, weight, E)
    jax.block_until_ready((gk, gv, lk))
    rgk, rgv, rlk = _reference(masking_reasons, weight, None, E)
    assert gk.shape == (B, N, E) and gv.shape == (B, N, E) and lk.shape == (B, N, E)
    assert gk.dtype == jnp.bfloat16
    assert jnp.allclose(gk.astype(jnp.float32), rgk, rtol=1e-2, atol=1e-2)
    assert jnp.allclose(gv.astype(jnp.float32), rgv, rtol=1e-2, atol=1e-2)
    assert jnp.allclose(lk.astype(jnp.float32), rlk, rtol=1e-2, atol=1e-2)

    # f32 output + bias path (checks the fused-weight math at full precision).
    gk32, gv32, lk32 = constraint_dynamic_embedding(
        masking_reasons, weight, E, bias, out_dtype=jnp.float32)
    jax.block_until_ready((gk32, gv32, lk32))
    rgk, rgv, rlk = _reference(masking_reasons, weight, bias, E)
    assert jnp.allclose(gk32, rgk, rtol=1e-5, atol=1e-4)
    assert jnp.allclose(gv32, rgv, rtol=1e-5, atol=1e-4)
    assert jnp.allclose(lk32, rlk, rtol=1e-5, atol=1e-4)

    print("KERNEL_OK")
</pallas_src>

<mosaic_0001>
module attributes {stable_mosaic.version = 11 : i64} {
  func.func @_constraint_dyn_emb_kernel(%arg0: i32, %arg1: memref<16x8xbf16, #tpu.memory_space<vmem>>, %arg2: memref<3x8x128xf32, #tpu.memory_space<vmem>>, %arg3: memref<16x128xbf16, #tpu.memory_space<vmem>>, %arg4: memref<16x128xbf16, #tpu.memory_space<vmem>>, %arg5: memref<16x128xbf16, #tpu.memory_space<vmem>>) attributes {dimension_semantics = [#tpu.dimension_semantics<parallel>], iteration_bounds = array<i64: 2>, scalar_prefetch = 0 : i64, scratch_operands = 0 : i64, tpu.core_type = #tpu.core_type<tc>, window_params = [{transform_indices = @transform_0, window_bounds = array<i64: 16, 8>}, {pipeline_mode = #tpu.pipeline_mode<synchronous>, transform_indices = @transform_1, window_bounds = array<i64: 3, 8, 128>}, {transform_indices = @transform_2, window_bounds = array<i64: 16, 128>}, {transform_indices = @transform_3, window_bounds = array<i64: 16, 128>}, {transform_indices = @transform_4, window_bounds = array<i64: 16, 128>}]} {
    %c0 = arith.constant 0 : index
    %c0_0 = arith.constant 0 : index
    %0 = vector.load %arg1[%c0, %c0_0] : memref<16x8xbf16, #tpu.memory_space<vmem>>, vector<16x8xbf16>
    %1 = arith.extf %0 : vector<16x8xbf16> to vector<16x8xf32>
    %c0_1 = arith.constant 0 : index
    %c0_2 = arith.constant 0 : index
    %c0_3 = arith.constant 0 : index
    %2 = vector.load %arg2[%c0_1, %c0_2, %c0_3] : memref<3x8x128xf32, #tpu.memory_space<vmem>>, vector<1x8x128xf32>
    %3 = vector.shape_cast %2 : vector<1x8x128xf32> to vector<8x128xf32>
    %cst = arith.constant dense<0.000000e+00> : vector<16x128xf32>
    %4 = tpu.matmul %1, %3, %cst {dimension_numbers = #tpu.dot_dimension_numbers<[1], [0], [0], [1], [0, 0, 1, 1], [], []>} : vector<16x8xf32>, vector<8x128xf32>, vector<16x128xf32> -> vector<16x128xf32>
    %5 = arith.truncf %4 : vector<16x128xf32> to vector<16x128xbf16>
    %c0_4 = arith.constant 0 : index
    %c0_5 = arith.constant 0 : index
    %6 = vector.load %arg3[%c0_4, %c0_5] : memref<16x128xbf16, #tpu.memory_space<vmem>>, vector<16x128xbf16>
    tpu.vector_store %arg3[%c0_4, %c0_5], %5 {strides = array<i32>} : memref<16x128xbf16, #tpu.memory_space<vmem>>, vector<16x128xbf16>,
    %c1 = arith.constant 1 : index
    %c0_6 = arith.constant 0 : index
    %c0_7 = arith.constant 0 : index
    %7 = vector.load %arg2[%c1, %c0_6, %c0_7] : memref<3x8x128xf32, #tpu.memory_space<vmem>>, vector<1x8x128xf32>
    %8 = vector.shape_cast %7 : vector<1x8x128xf32> to vector<8x128xf32>
    %cst_8 = arith.constant dense<0.000000e+00> : vector<16x128xf32>
    %9 = tpu.matmul %1, %8, %cst_8 {dimension_numbers = #tpu.dot_dimension_numbers<[1], [0], [0], [1], [0, 0, 1, 1], [], []>} : vector<16x8xf32>, vector<8x128xf32>, vector<16x128xf32> -> vector<16x128xf32>
    %10 = arith.truncf %9 : vector<16x128xf32> to vector<16x128xbf16>
    %c0_9 = arith.constant 0 : index
    %c0_10 = arith.constant 0 : index
    %11 = vector.load %arg4[%c0_9, %c0_10] : memref<16x128xbf16, #tpu.memory_space<vmem>>, vector<16x128xbf16>
    tpu.vector_store %arg4[%c0_9, %c0_10], %10 {strides = array<i32>} : memref<16x128xbf16, #tpu.memory_space<vmem>>, vector<16x128xbf16>,
    %c2 = arith.constant 2 : index
    %c0_11 = arith.constant 0 : index
    %c0_12 = arith.constant 0 : index
    %12 = vector.load %arg2[%c2, %c0_11, %c0_12] : memref<3x8x128xf32, #tpu.memory_space<vmem>>, vector<1x8x128xf32>
    %13 = vector.shape_cast %12 : vector<1x8x128xf32> to vector<8x128xf32>
    %cst_13 = arith.constant dense<0.000000e+00> : vector<16x128xf32>
    %14 = tpu.matmul %1, %13, %cst_13 {dimension_numbers = #tpu.dot_dimension_numbers<[1], [0], [0], [1], [0, 0, 1, 1], [], []>} : vector<16x8xf32>, vector<8x128xf32>, vector<16x128xf32> -> vector<16x128xf32>
    %15 = arith.truncf %14 : vector<16x128xf32> to vector<16x128xbf16>
    %c0_14 = arith.constant 0 : index
    %c0_15 = arith.constant 0 : index
    %16 = vector.load %arg5[%c0_14, %c0_15] : memref<16x128xbf16, #tpu.memory_space<vmem>>, vector<16x128xbf16>
    tpu.vector_store %arg5[%c0_14, %c0_15], %15 {strides = array<i32>} : memref<16x128xbf16, #tpu.memory_space<vmem>>, vector<16x128xbf16>,
    return
  }
  func.func @transform_0(%arg0: i32) -> (i32, i32) {
    %c0_i32 = arith.constant 0 : i32
    %c0_i32_0 = arith.constant 0 : i32
    return %arg0, %c0_i32 : i32, i32
  }
  func.func @transform_1(%arg0: i32) -> (i32, i32, i32) {
    %c0_i32 = arith.constant 0 : i32
    %c0_i32_0 = arith.constant 0 : i32
    %c0_i32_1 = arith.constant 0 : i32
    %c0_i32_2 = arith.constant 0 : i32
    return %c0_i32, %c0_i32_0, %c0_i32_1 : i32, i32, i32
  }
  func.func @transform_2(%arg0: i32) -> (i32, i32) {
    %c0_i32 = arith.constant 0 : i32
    %c0_i32_0 = arith.constant 0 : i32
    return %arg0, %c0_i32 : i32, i32
  }
  func.func @transform_3(%arg0: i32) -> (i32, i32) {
    %c0_i32 = arith.constant 0 : i32
    %c0_i32_0 = arith.constant 0 : i32
    return %arg0, %c0_i32 : i32, i32
  }
  func.func @transform_4(%arg0: i32) -> (i32, i32) {
    %c0_i32 = arith.constant 0 : i32
    %c0_i32_0 = arith.constant 0 : i32
    return %arg0, %c0_i32 : i32, i32
  }
}

</mosaic_0001>

<llo_original>
// kernel: constraint_dynamic_embedding.1
$region0: #{constraint_dynamic_embedding.1}
  #allocation0 [shape = 'u32[]', space=smem, size = 0x4, offset = 0x4, fixed_abs, tag = 'smem constant byte address 0x4 - core index']
  #allocation1 [shape = 'u32[144,128]{1,0:T(1,128)}', space=vmem, size = 0x12000, scoped, tag = 'internal scratch']
  %s0 = inlined_call_operand.vmem [shape: bf16[32,8], index: 0, kind: input, shape index: {}]
  %s1 = inlined_call_operand.vmem [shape: f32[3,8,128], index: 1, kind: input, shape index: {}]
  %s2 = inlined_call_operand.hbm [shape: bf16[32,128], index: 2, kind: output, shape index: {0}]
  %s3 = inlined_call_operand.hbm [shape: bf16[32,128], index: 3, kind: output, shape index: {1}]
  %s4 = inlined_call_operand.hbm [shape: bf16[32,128], index: 4, kind: output, shape index: {2}]
  %5 = xla_tuple %s2, %s3, %s4
  %s6 = sld [smem:[#allocation0]]
  $region57: #{constraint_dynamic_embedding.1} parent=0
    _
  %s8 = ssub.s32 1, %s6
  %s9 = scalar_select 0, %s8, %s6
  $region1: #{constraint_dynamic_embedding.1} parent=0
    #allocation2 [shape = 'u8[8192]{0}', space=vmem, size = 0x2000, scoped, tag = 'output window, operand 0']
    #allocation3 [shape = 's32[2]{0}', space=sflag, size = 0x8, scoped, tag = 'scoped memory for constraint_dynamic_embedding.1']
    #allocation4 [shape = 'u8[8192]{0}', space=vmem, size = 0x2000, scoped, tag = 'output window, operand 1']
    #allocation5 [shape = 's32[2]{0}', space=sflag, size = 0x8, scoped, tag = 'scoped memory for constraint_dynamic_embedding.1']
    #allocation6 [shape = 'u8[8192]{0}', space=vmem, size = 0x2000, scoped, tag = 'output window, operand 2']
    %10 = vsyncpa [#allocation3], 0
    %s11 = scalar_lea.sflag [#allocation3], 1
    %12 = vsyncpa %s11, 0
    %13 = vsyncpa [#allocation5], 0
    %s14 = scalar_lea.sflag [#allocation5], 1
    %15 = vsyncpa %s14, 0
    loop: start=0, step=1, limit=4
    $region2: #{constraint_dynamic_embedding.1} parent=1 // loop_pre_header
      _
    $region3: #{constraint_dynamic_embedding.1} parent=1 // loop_header
      %s17 = sphi 0, %s21
      %p18 = scmp.ge.s32.totalorder %s17, 4
      %s27 = sphi 0, %s29
      %s30 = sphi 0, %s27
      %s31 = sphi 0, %s30
      %s47 = sphi 0, %s31
      %s51 = sphi 0, %s51
      %s53 = sphi 0, %s51
      %s54 = sphi 0, %s53
      %s68 = sphi 0, %s54
      %s74 = sphi 0, %s76
      %s77 = sphi 0, %s74
      %s78 = sphi 0, %s77
      %s94 = sphi 0, %s78
      %s100 = sphi 0, %s102
      %s103 = sphi 0, %s100
      %s104 = sphi 0, %s103
      %s120 = sphi 0, %s104
      %s126 = sphi 0, %s128
      %s129 = sphi 0, %s126
      %s130 = sphi 0, %s129
      %s146 = sphi 0, %s130
    $region4: #{constraint_dynamic_embedding.1} parent=1 // loop_header_branch
      %20 = sbr.rel (%p18) target = $region8
    $region5: #{constraint_dynamic_embedding.1} parent=1 // loop_body
      %s22 = ssub.s32 %s17, 1
      %s23 = ssub.s32 %s17, 2
      %s24 = sadd.s32 %s17, 1
      %s25 = ssub.s32 %s17, %s24
      %p26 = scmp.eq.s32.totalorder %s25, 0
      %s28 = sadd.s32 %s27, 1
      %s29 = scalar_select %p26, %s27, %s28
      %p32 = pneg %p26
      %p33 = scmp.eq.s32.totalorder %s17, 1
      %p34 = por %p32, %p33
      %p35 = scmp.ne.s32.totalorder %s27, %s30
      %p36 = scmp.eq.s32.totalorder %s17, 0
      %p37 = por %p35, %p36
      %p38 = scmp.ne.s32.totalorder %s27, %s30
      %p39 = scmp.eq.s32.totalorder %s22, 1
      %p40 = por %p38, %p39
      %p41 = scmp.ne.s32.totalorder %s30, %s31
      %p42 = scmp.eq.s32.totalorder %s22, 0
      %p43 = por %p41, %p42
      %p44 = scmp.ne.s32.totalorder %s30, %s31
      %p45 = scmp.eq.s32.totalorder %s23, 1
      %p46 = por %p44, %p45
      %p48 = scmp.ne.s32.totalorder %s31, %s47
      %p49 = scmp.eq.s32.totalorder %s23, 0
      %p50 = por %p48, %p49
      %s52 = sadd.s32 %s51, 1
      %p55 = scmp.eq.s32.totalorder %s17, 1
      %p56 = scmp.ne.s32.totalorder %s51, %s53
      %p57 = scmp.eq.s32.totalorder %s17, 0
      %p58 = por %p56, %p57
      %p59 = scmp.ne.s32.totalorder %s51, %s53
      %p60 = scmp.eq.s32.totalorder %s22, 1
      %p61 = por %p59, %p60
      %p62 = scmp.ne.s32.totalorder %s53, %s54
      %p63 = scmp.eq.s32.totalorder %s22, 0
      %p64 = por %p62, %p63
      %p65 = scmp.ne.s32.totalorder %s53, %s54
      %p66 = scmp.eq.s32.totalorder %s23, 1
      %p67 = por %p65, %p66
      %p69 = scmp.ne.s32.totalorder %s54, %s68
      %p70 = scmp.eq.s32.totalorder %s23, 0
      %p71 = por %p69, %p70
      %s72 = ssub.s32 %s17, %s24
      %p73 = scmp.eq.s32.totalorder %s72, 0
      %s75 = sadd.s32 %s74, 1
      %s76 = scalar_select %p73, %s74, %s75
      %p79 = pneg %p73
      %p80 = scmp.eq.s32.totalorder %s17, 1
      %p81 = por %p79, %p80
      %p82 = scmp.ne.s32.totalorder %s74, %s77
      %p83 = scmp.eq.s32.totalorder %s17, 0
      %p84 = por %p82, %p83
      %p85 = scmp.ne.s32.totalorder %s74, %s77
      %p86 = scmp.eq.s32.totalorder %s22, 1
      %p87 = por %p85, %p86
      %p88 = scmp.ne.s32.totalorder %s77, %s78
      %p89 = scmp.eq.s32.totalorder %s22, 0
      %p90 = por %p88, %p89
      %p91 = scmp.ne.s32.totalorder %s77, %s78
      %p92 = scmp.eq.s32.totalorder %s23, 1
      %p93 = por %p91, %p92
      %p95 = scmp.ne.s32.totalorder %s78, %s94
      %p96 = scmp.eq.s32.totalorder %s23, 0
      %p97 = por %p95, %p96
      %s98 = ssub.s32 %s17, %s24
      %p99 = scmp.eq.s32.totalorder %s98, 0
      %s101 = sadd.s32 %s100, 1
      %s102 = scalar_select %p99, %s100, %s101
      %p105 = pneg %p99
      %p106 = scmp.eq.s32.totalorder %s17, 1
      %p107 = por %p105, %p106
      %p108 = scmp.ne.s32.totalorder %s100, %s103
      %p109 = scmp.eq.s32.totalorder %s17, 0
      %p110 = por %p108, %p109
      %p111 = scmp.ne.s32.totalorder %s100, %s103
      %p112 = scmp.eq.s32.totalorder %s22, 1
      %p113 = por %p111, %p112
      %p114 = scmp.ne.s32.totalorder %s103, %s104
      %p115 = scmp.eq.s32.totalorder %s22, 0
      %p116 = por %p114, %p115
      %p117 = scmp.ne.s32.totalorder %s103, %s104
      %p118 = scmp.eq.s32.totalorder %s23, 1
      %p119 = por %p117, %p118
      %p121 = scmp.ne.s32.totalorder %s104, %s120
      %p122 = scmp.eq.s32.totalorder %s23, 0
      %p123 = por %p121, %p122
      %s124 = ssub.s32 %s17, %s24
      %p125 = scmp.eq.s32.totalorder %s124, 0
      %s127 = sadd.s32 %s126, 1
      %s128 = scalar_select %p125, %s126, %s127
      %p131 = pneg %p125
      %p132 = scmp.eq.s32.totalorder %s17, 1
      %p133 = por %p131, %p132
      %p134 = scmp.ne.s32.totalorder %s126, %s129
      %p135 = scmp.eq.s32.totalorder %s17, 0
      %p136 = por %p134, %p135
      %p137 = scmp.ne.s32.totalorder %s126, %s129
      %p138 = scmp.eq.s32.totalorder %s22, 1
      %p139 = por %p137, %p138
      %p140 = scmp.ne.s32.totalorder %s129, %s130
      %p141 = scmp.eq.s32.totalorder %s22, 0
      %p142 = por %p140, %p141
      %p143 = scmp.ne.s32.totalorder %s129, %s130
      %p144 = scmp.eq.s32.totalorder %s23, 1
      %p145 = por %p143, %p144
      %p147 = scmp.ne.s32.totalorder %s130, %s146
      %p148 = scmp.eq.s32.totalorder %s23, 0
      %p149 = por %p147, %p148
      %p150 = scmp.le.s32.totalorder 1, %s17
      %p151 = scmp.lt.s32.totalorder %s17, 3
      %p152 = pnand %p150, %p151
      %p153 = pneg %p152
      // Predicated region
      $region9: #{constraint_dynamic_embedding.1} parent=5 // pred_check
        _
      $region10: #{constraint_dynamic_embedding.1} parent=5 // pred_check_branch
        %155 = sbr.rel (%p152) target = $region12
      $region11: #{constraint_dynamic_embedding.1} parent=5 // pred_region
        %s156 = ssub.s32 %s17, 1
        // Predicated region
        $region13: #{constraint_dynamic_embedding.1} parent=11 // pred_check
          %p157 = pneg %p64
        $region14: #{constraint_dynamic_embedding.1} parent=11 // pred_check_branch
          %159 = sbr.rel (%p157) target = $region16
        $region15: #{constraint_dynamic_embedding.1} parent=11 // pred_region
          _
        $region16: #{constraint_dynamic_embedding.1} parent=11 // pred_fallthru
          _
      $region12: #{constraint_dynamic_embedding.1} parent=5 // pred_fallthru
        _
      %p160 = scmp.lt.s32.totalorder %s17, 2
      // Predicated region
      $region17: #{constraint_dynamic_embedding.1} parent=5 // pred_check
        %p161 = pneg %p160
      $region18: #{constraint_dynamic_embedding.1} parent=5 // pred_check_branch
        %163 = sbr.rel (%p161) target = $region20
      $region19: #{constraint_dynamic_embedding.1} parent=5 // pred_region
        // Predicated region
        $region21: #{constraint_dynamic_embedding.1} parent=19 // pred_check
          %p164 = pneg %p37
        $region22: #{constraint_dynamic_embedding.1} parent=19 // pred_check_branch
          %166 = sbr.rel (%p164) target = $region24
        $region23: #{constraint_dynamic_embedding.1} parent=19 // pred_region
          %s167 = smul.u32 2, %s17
          %p168 = scmp.lt.s32.totalorder %s167, 3
          %s169 = scalar_select %p168, %s167, 3
          %s170 = smul.addr %s169, 4
          %s171 = scalar_lea.vmem %s0, %s170
          %s172 = smul.u32 2, %s17
        $region24: #{constraint_dynamic_embedding.1} parent=19 // pred_fallthru
          _
      $region20: #{constraint_dynamic_embedding.1} parent=5 // pred_fallthru
        _
      %p173 = scmp.le.s32.totalorder 1, %s17
      %p174 = scmp.lt.s32.totalorder %s17, 3
      %p175 = pnand %p173, %p174
      %p176 = pneg %p175
      // Predicated region
      $region25: #{constraint_dynamic_embedding.1} parent=5 // pred_check
        _
      $region26: #{constraint_dynamic_embedding.1} parent=5 // pred_check_branch
        %178 = sbr.rel (%p175) target = $region28
      $region27: #{constraint_dynamic_embedding.1} parent=5 // pred_region
        %s179 = ssub.s32 %s17, 1
        %s180 = smul.u32 2, %s22
        %p181 = scmp.lt.s32.totalorder %s180, 3
        %s182 = scalar_select %p181, %s180, 3
        %s183 = smul.addr %s182, 4
        %s184 = scalar_lea.vmem %s0, %s183
        %p185 = pneg %p43
        %p186 = pneg %p40
        %p187 = pneg %p64
        %p188 = pneg %p61
        %p189 = pneg %p90
        %p190 = pneg %p87
        %s191 = sand.u32 %s77, 1
        %s192 = scalar_lea.sflag [#allocation3], %s191
        %s193 = sand.u32 %s77, 1
        %s194 = smul.addr %s193, 8
        %s195 = scalar_lea.vmem [#allocation2], %s194
        %p196 = pneg %p116
        %p197 = pneg %p113
        %s198 = sand.u32 %s22, 1
        %s199 = scalar_lea.sflag [#allocation5], %s198
        %s200 = sand.u32 %s103, 1
        %s201 = smul.addr %s200, 8
        %s202 = scalar_lea.vmem [#allocation4], %s201
        %p203 = pneg %p142
        %p204 = pneg %p139
        %s205 = sand.u32 %s22, 1
        %s206 = scalar_lea.sflag [#allocation5], %s205
        %s207 = sand.u32 %s129, 1
        %s208 = smul.addr %s207, 8
        %s209 = scalar_lea.vmem [#allocation6], %s208
        %s210 = smul.u32 2, %s22
        %p211 = scmp.lt.s32.totalorder %s210, 3
        %s212 = scalar_select %p211, %s210, 3
        %s213 = smul.addr %s212, 4
        %s214 = scalar_lea.vmem %s0, %s213
        %s215 = smul.u32 2, %s22
        %s216 = smul.u32 2, %s22
        %s217 = smul.u32 2, %s22
        %s218 = smul.u32 2, %s22
        %v219 = vld [vmem:[%s214] sm:$0xf]
        %v220 = vld [vmem:[%s214 + $0x4] sm:$0xf]
        %v221 = vunpack.c.l.bf16 %v219
        %v222 = vunpack.c.l.bf16 %v220
        %v223 = vld [vmem:[%s1] sm:$0xff]
        %vm224 = vcmask 64512
        %v226 = vsel %vm224, %v221, 0
        %v229 = vsel %vm224, %v222, 0
        %231 = vmatprep.subr.mxu0 0.0
        %232 = vmatpush1.msra.mxu0 %v223
        %233 = vmatprep.subr.mxu0 0.0
        %234 = vmatpush1.msra.mxu0 0.0
        %235 = vmatprep.subr.mxu0 0.0
        %236 = vmatpush1.msra.mxu0 0.0
        %237 = vmatprep.subr.mxu0 0.0
        %238 = vmatpush1.msra.mxu0 0.0
        %239 = vmatprep.subr.mxu0 0.0
        %240 = vmatpush1.msra.mxu0 0.0
        %241 = vmatprep.subr.mxu0 0.0
        %242 = vmatpush1.msra.mxu0 0.0
        %243 = vmatprep.subr.mxu0 0.0
        %244 = vmatpush1.msra.mxu0 0.0
        %245 = vmatprep.subr.mxu0 0.0
        %246 = vmatpush1.msra.mxu0 0.0
        %247 = vmatprep.subr.mxu0 0.0
        %248 = vmatpush1.msra.mxu0 0.0
        %249 = vmatprep.subr.mxu0 0.0
        %250 = vmatpush1.msra.mxu0 0.0
        %251 = vmatprep.subr.mxu0 0.0
        %252 = vmatpush1.msra.mxu0 0.0
        %253 = vmatprep.subr.mxu0 0.0
        %254 = vmatpush1.msra.mxu0 0.0
        %255 = vmatprep.subr.mxu0 0.0
        %256 = vmatpush1.msra.mxu0 0.0
        %257 = vmatprep.subr.mxu0 0.0
        %258 = vmatpush1.msra.mxu0 0.0
        %259 = vmatprep.subr.mxu0 0.0
        %260 = vmatpush1.msra.mxu0 0.0
        %261 = vmatprep.subr.mxu0 0.0
        %262 = vmatpush1.msra.mxu0 0.0
        %263 = vmatprep.subr.mxu0 0.0
        %264 = vmatpush1.msra.mxu0 0.0
        %265 = vmatprep.subr.mxu0 0.0
        %266 = vmatpush1.msra.mxu0 0.0
        %267 = vmatprep.subr.mxu0 0.0
        %268 = vmatpush1.msra.mxu0 0.0
        %269 = vmatprep.subr.mxu0 0.0
        %270 = vmatpush1.msra.mxu0 0.0
        %271 = vmatprep.subr.mxu0 0.0
        %272 = vmatpush1.msra.mxu0 0.0
        %273 = vmatprep.subr.mxu0 0.0
        %274 = vmatpush1.msra.mxu0 0.0
        %275 = vmatprep.subr.mxu0 0.0
        %276 = vmatpush1.msra.mxu0 0.0
        %277 = vmatprep.subr.mxu0 0.0
        %278 = vmatpush1.msra.mxu0 0.0
        %279 = vmatprep.subr.mxu0 0.0
        %280 = vmatpush1.msra.mxu0 0.0
        %281 = vmatprep.subr.mxu0 0.0
        %282 = vmatpush1.msra.mxu0 0.0
        %283 = vmatprep.subr.mxu0 0.0
        %284 = vmatpush1.msra.mxu0 0.0
        %285 = vmatprep.subr.mxu0 0.0
        %286 = vmatpush1.msra.mxu0 0.0
        %287 = vmatprep.subr.mxu0 0.0
        %288 = vmatpush1.msra.mxu0 0.0
        %289 = vmatprep.subr.mxu0 0.0
        %290 = vmatpush1.msra.mxu0 0.0
        %291 = vmatprep.subr.mxu0 0.0
        %292 = vmatpush1.msra.mxu0 0.0
        %293 = vmatprep.subr.mxu0 0.0
        %294 = vmatpush1.msra.mxu0 0.0
        %295 = vmatprep.mubr.f32.mxu0 0.0
        %296 = vmatmul.mubr.f32.gmra.mrb[0].mxu0 %v226
        %v297 = vpop.f32.mrb[0].mxu0
        %v298 = vadd.f32 0.0, %v297
        %v299 = vpop.f32.mrb[0].mxu0
        %300 = vmatprep.mubr.f32.mxu0 0.0
        %301 = vmatmul.mubr.f32.gmra.mrb[0].mxu0 %v229
        %v302 = vpop.f32.mrb[0].mxu0
        %v303 = vadd.f32 0.0, %v302
        %v304 = vpop.f32.mrb[0].mxu0
        %305 = vdwg.mxu0
        %v306 = vpack.c.bf16 %v303, %v298
        %v308 = vunpack.c.l.b16 %v306
        %v309 = vunpack.c.h.b16 %v306
        %v310 = vpack.c.b16 %v308, %v308
        %v311 = vpack.c.b16 %v309, %v309
        %314 = vst [vmem:[%s195] sm:$0xf] %v310
        %315 = vst [vmem:[%s195 + $0x4] sm:$0xf] %v311
        %s316 = scalar_lea.vmem %s1, 8
        %v317 = vld [vmem:[%s316] sm:$0xff]
        %318 = vmatprep.subr.mxu0 0.0
        %319 = vmatpush1.msra.mxu0 %v317
        %320 = vmatprep.subr.mxu0 0.0
        %321 = vmatpush1.msra.mxu0 0.0
        %322 = vmatprep.subr.mxu0 0.0
        %323 = vmatpush1.msra.mxu0 0.0
        %324 = vmatprep.subr.mxu0 0.0
        %325 = vmatpush1.msra.mxu0 0.0
        %326 = vmatprep.subr.mxu0 0.0
        %327 = vmatpush1.msra.mxu0 0.0
        %328 = vmatprep.subr.mxu0 0.0
        %329 = vmatpush1.msra.mxu0 0.0
        %330 = vmatprep.subr.mxu0 0.0
        %331 = vmatpush1.msra.mxu0 0.0
        %332 = vmatprep.subr.mxu0 0.0
        %333 = vmatpush1.msra.mxu0 0.0
        %334 = vmatprep.subr.mxu0 0.0
        %335 = vmatpush1.msra.mxu0 0.0
        %336 = vmatprep.subr.mxu0 0.0
        %337 = vmatpush1.msra.mxu0 0.0
        %338 = vmatprep.subr.mxu0 0.0
        %339 = vmatpush1.msra.mxu0 0.0
        %340 = vmatprep.subr.mxu0 0.0
        %341 = vmatpush1.msra.mxu0 0.0
        %342 = vmatprep.subr.mxu0 0.0
        %343 = vmatpush1.msra.mxu0 0.0
        %344 = vmatprep.subr.mxu0 0.0
        %345 = vmatpush1.msra.mxu0 0.0
        %346 = vmatprep.subr.mxu0 0.0
        %347 = vmatpush1.msra.mxu0 0.0
        %348 = vmatprep.subr.mxu0 0.0
        %349 = vmatpush1.msra.mxu0 0.0
        %350 = vmatprep.subr.mxu0 0.0
        %351 = vmatpush1.msra.mxu0 0.0
        %352 = vmatprep.subr.mxu0 0.0
        %353 = vmatpush1.msra.mxu0 0.0
        %354 = vmatprep.subr.mxu0 0.0
        %355 = vmatpush1.msra.mxu0 0.0
        %356 = vmatprep.subr.mxu0 0.0
        %357 = vmatpush1.msra.mxu0 0.0
        %358 = vmatprep.subr.mxu0 0.0
        %359 = vmatpush1.msra.mxu0 0.0
        %360 = vmatprep.subr.mxu0 0.0
        %361 = vmatpush1.msra.mxu0 0.0
        %362 = vmatprep.subr.mxu0 0.0
        %363 = vmatpush1.msra.mxu0 0.0
        %364 = vmatprep.subr.mxu0 0.0
        %365 = vmatpush1.msra.mxu0 0.0
        %366 = vmatprep.subr.mxu0 0.0
        %367 = vmatpush1.msra.mxu0 0.0
        %368 = vmatprep.subr.mxu0 0.0
        %369 = vmatpush1.msra.mxu0 0.0
        %370 = vmatprep.subr.mxu0 0.0
        %371 = vmatpush1.msra.mxu0 0.0
        %372 = vmatprep.subr.mxu0 0.0
        %373 = vmatpush1.msra.mxu0 0.0
        %374 = vmatprep.subr.mxu0 0.0
        %375 = vmatpush1.msra.mxu0 0.0
        %376 = vmatprep.subr.mxu0 0.0
        %377 = vmatpush1.msra.mxu0 0.0
        %378 = vmatprep.subr.mxu0 0.0
        %379 = vmatpush1.msra.mxu0 0.0
        %380 = vmatprep.subr.mxu0 0.0
        %381 = vmatpush1.msra.mxu0 0.0
        %382 = vmatprep.mubr.f32.mxu0 0.0
        %383 = vmatmul.mubr.f32.gmra.mrb[0].mxu0 %v226
        %v384 = vpop.f32.mrb[0].mxu0
        %v385 = vadd.f32 0.0, %v384
        %v386 = vpop.f32.mrb[0].mxu0
        %387 = vmatprep.mubr.f32.mxu0 0.0
        %388 = vmatmul.mubr.f32.gmra.mrb[0].mxu0 %v229
        %v389 = vpop.f32.mrb[0].mxu0
        %v390 = vadd.f32 0.0, %v389
        %v391 = vpop.f32.mrb[0].mxu0
        %392 = vdwg.mxu0
        %v393 = vpack.c.bf16 %v390, %v385
        %v395 = vunpack.c.l.b16 %v393
        %v396 = vunpack.c.h.b16 %v393
        %v397 = vpack.c.b16 %v395, %v395
        %v398 = vpack.c.b16 %v396, %v396
        %401 = vst [vmem:[%s202] sm:$0xf] %v397
        %402 = vst [vmem:[%s202 + $0x4] sm:$0xf] %v398
        %s403 = scalar_lea.vmem %s1, 16
        %v404 = vld [vmem:[%s403] sm:$0xff]
        %405 = vmatprep.subr.mxu0 0.0
        %406 = vmatpush1.msra.mxu0 %v404
        %407 = vmatprep.subr.mxu0 0.0
        %408 = vmatpush1.msra.mxu0 0.0
        %409 = vmatprep.subr.mxu0 0.0
        %410 = vmatpush1.msra.mxu0 0.0
        %411 = vmatprep.subr.mxu0 0.0
        %412 = vmatpush1.msra.mxu0 0.0
        %413 = vmatprep.subr.mxu0 0.0
        %414 = vmatpush1.msra.mxu0 0.0
        %415 = vmatprep.subr.mxu0 0.0
        %416 = vmatpush1.msra.mxu0 0.0
        %417 = vmatprep.subr.mxu0 0.0
        %418 = vmatpush1.msra.mxu0 0.0
        %419 = vmatprep.subr.mxu0 0.0
        %420 = vmatpush1.msra.mxu0 0.0
        %421 = vmatprep.subr.mxu0 0.0
        %422 = vmatpush1.msra.mxu0 0.0
        %423 = vmatprep.subr.mxu0 0.0
        %424 = vmatpush1.msra.mxu0 0.0
        %425 = vmatprep.subr.mxu0 0.0
        %426 = vmatpush1.msra.mxu0 0.0
        %427 = vmatprep.subr.mxu0 0.0
        %428 = vmatpush1.msra.mxu0 0.0
        %429 = vmatprep.subr.mxu0 0.0
        %430 = vmatpush1.msra.mxu0 0.0
        %431 = vmatprep.subr.mxu0 0.0
        %432 = vmatpush1.msra.mxu0 0.0
        %433 = vmatprep.subr.mxu0 0.0
        %434 = vmatpush1.msra.mxu0 0.0
        %435 = vmatprep.subr.mxu0 0.0
        %436 = vmatpush1.msra.mxu0 0.0
        %437 = vmatprep.subr.mxu0 0.0
        %438 = vmatpush1.msra.mxu0 0.0
        %439 = vmatprep.subr.mxu0 0.0
        %440 = vmatpush1.msra.mxu0 0.0
        %441 = vmatprep.subr.mxu0 0.0
        %442 = vmatpush1.msra.mxu0 0.0
        %443 = vmatprep.subr.mxu0 0.0
        %444 = vmatpush1.msra.mxu0 0.0
        %445 = vmatprep.subr.mxu0 0.0
        %446 = vmatpush1.msra.mxu0 0.0
        %447 = vmatprep.subr.mxu0 0.0
        %448 = vmatpush1.msra.mxu0 0.0
        %449 = vmatprep.subr.mxu0 0.0
        %450 = vmatpush1.msra.mxu0 0.0
        %451 = vmatprep.subr.mxu0 0.0
        %452 = vmatpush1.msra.mxu0 0.0
        %453 = vmatprep.subr.mxu0 0.0
        %454 = vmatpush1.msra.mxu0 0.0
        %455 = vmatprep.subr.mxu0 0.0
        %456 = vmatpush1.msra.mxu0 0.0
        %457 = vmatprep.subr.mxu0 0.0
        %458 = vmatpush1.msra.mxu0 0.0
        %459 = vmatprep.subr.mxu0 0.0
        %460 = vmatpush1.msra.mxu0 0.0
        %461 = vmatprep.subr.mxu0 0.0
        %462 = vmatpush1.msra.mxu0 0.0
        %463 = vmatprep.subr.mxu0 0.0
        %464 = vmatpush1.msra.mxu0 0.0
        %465 = vmatprep.subr.mxu0 0.0
        %466 = vmatpush1.msra.mxu0 0.0
        %467 = vmatprep.subr.mxu0 0.0
        %468 = vmatpush1.msra.mxu0 0.0
        %469 = vmatprep.mubr.f32.mxu0 0.0
        %470 = vmatmul.mubr.f32.gmra.mrb[0].mxu0 %v226
        %v471 = vpop.f32.mrb[0].mxu0
        %v472 = vadd.f32 0.0, %v471
        %v473 = vpop.f32.mrb[0].mxu0
        %474 = vmatprep.mubr.f32.mxu0 0.0
        %475 = vmatmul.mubr.f32.gmra.mrb[0].mxu0 %v229
        %v476 = vpop.f32.mrb[0].mxu0
        %v477 = vadd.f32 0.0, %v476
        %v478 = vpop.f32.mrb[0].mxu0
        %479 = vdwg.mxu0
        %v480 = vpack.c.bf16 %v477, %v472
        %v482 = vunpack.c.l.b16 %v480
        %v483 = vunpack.c.h.b16 %v480
        %v484 = vpack.c.b16 %v482, %v482
        %v485 = vpack.c.b16 %v483, %v483
        %488 = vst [vmem:[%s209] sm:$0xf] %v484
        %489 = vst [vmem:[%s209 + $0x4] sm:$0xf] %v485
        %s490 = sand.u32 %s77, 1
        %s491 = scalar_lea.sflag [#allocation3], %s490
        %s492 = sand.u32 %s77, 1
        %s493 = smul.addr %s492, 8
        %s494 = scalar_lea.vmem [#allocation2], %s493
        %s495 = sand.u32 %s22, 1
        %s496 = scalar_lea.sflag [#allocation5], %s495
        %s497 = sand.u32 %s103, 1
        %s498 = smul.addr %s497, 8
        %s499 = scalar_lea.vmem [#allocation4], %s498
        %s500 = sand.u32 %s22, 1
        %s501 = scalar_lea.sflag [#allocation5], %s500
        %s502 = sand.u32 %s129, 1
        %s503 = smul.addr %s502, 8
        %s504 = scalar_lea.vmem [#allocation6], %s503
        // Predicated region
        $region29: #{constraint_dynamic_embedding.1} parent=27 // pred_check
          %p505 = pneg %p87
        $region30: #{constraint_dynamic_embedding.1} parent=27 // pred_check_branch
          %507 = sbr.rel (%p505) target = $region32
        $region31: #{constraint_dynamic_embedding.1} parent=27 // pred_region
          %s508 = smul.u32 2, %s22
          %s510 = ssub.s32 128, 128
          %511 = vsyncadd %s491, %s510
          %s512 = smul.addr %s508, 64
          %s513 = scalar_lea.hbm %s2, %s512
          %s514 = sshll.u32 %s494, 4
          %s515 = int_to_ptr.vmem [resolvable:$true] %s514
          %520 = dma.vmem_to_hbm [thread:$0]  %s515, 128, %s513, %s491, 64, 64, 4
        $region32: #{constraint_dynamic_embedding.1} parent=27 // pred_fallthru
          _
        // Predicated region
        $region33: #{constraint_dynamic_embedding.1} parent=27 // pred_check
          %p521 = pneg %p113
        $region34: #{constraint_dynamic_embedding.1} parent=27 // pred_check_branch
          %523 = sbr.rel (%p521) target = $region36
        $region35: #{constraint_dynamic_embedding.1} parent=27 // pred_region
          %s524 = smul.u32 2, %s22
          %s526 = ssub.s32 128, 128
          %527 = vsyncadd %s496, %s526
          %s528 = smul.addr %s524, 64
          %s529 = scalar_lea.hbm %s3, %s528
          %s530 = sshll.u32 %s499, 4
          %s531 = int_to_ptr.vmem [resolvable:$true] %s530
          %536 = dma.vmem_to_hbm [thread:$0]  %s531, 128, %s529, %s496, 64, 64, 4
        $region36: #{constraint_dynamic_embedding.1} parent=27 // pred_fallthru
          _
        // Predicated region
        $region37: #{constraint_dynamic_embedding.1} parent=27 // pred_check
          %p537 = pneg %p139
        $region38: #{constraint_dynamic_embedding.1} parent=27 // pred_check_branch
          %539 = sbr.rel (%p537) target = $region40
        $region39: #{constraint_dynamic_embedding.1} parent=27 // pred_region
          %s540 = smul.u32 2, %s22
          %s542 = ssub.s32 128, 128
          %543 = vsyncadd %s501, %s542
          %s544 = smul.addr %s540, 64
          %s545 = scalar_lea.hbm %s4, %s544
          %s546 = sshll.u32 %s504, 4
          %s547 = int_to_ptr.vmem [resolvable:$true] %s546
          %552 = dma.vmem_to_hbm [thread:$0]  %s547, 128, %s545, %s501, 64, 64, 4
        $region40: #{constraint_dynamic_embedding.1} parent=27 // pred_fallthru
          _
      $region28: #{constraint_dynamic_embedding.1} parent=5 // pred_fallthru
        _
      %p553 = scmp.le.s32.totalorder 2, %s17
      // Predicated region
      $region41: #{constraint_dynamic_embedding.1} parent=5 // pred_check
        %p554 = pneg %p553
      $region42: #{constraint_dynamic_embedding.1} parent=5 // pred_check_branch
        %556 = sbr.rel (%p554) target = $region44
      $region43: #{constraint_dynamic_embedding.1} parent=5 // pred_region
        %s557 = ssub.s32 %s17, 2
        // Predicated region
        $region45: #{constraint_dynamic_embedding.1} parent=43 // pred_check
          %p558 = pneg %p93
        $region46: #{constraint_dynamic_embedding.1} parent=43 // pred_check_branch
          %560 = sbr.rel (%p558) target = $region48
        $region47: #{constraint_dynamic_embedding.1} parent=43 // pred_region
          %s561 = sand.u32 %s78, 1
          %s562 = scalar_lea.sflag [#allocation3], %s561
          %s563 = sand.u32 %s78, 1
          %s564 = smul.addr %s563, 8
          %s565 = scalar_lea.vmem [#allocation2], %s564
          %566 = dma.done %s562, 128
        $region48: #{constraint_dynamic_embedding.1} parent=43 // pred_fallthru
          _
        // Predicated region
        $region49: #{constraint_dynamic_embedding.1} parent=43 // pred_check
          %p567 = pneg %p119
        $region50: #{constraint_dynamic_embedding.1} parent=43 // pred_check_branch
          %569 = sbr.rel (%p567) target = $region52
        $region51: #{constraint_dynamic_embedding.1} parent=43 // pred_region
          %s570 = sand.u32 %s23, 1
          %s571 = scalar_lea.sflag [#allocation5], %s570
          %s572 = sand.u32 %s104, 1
          %s573 = smul.addr %s572, 8
          %s574 = scalar_lea.vmem [#allocation4], %s573
          %575 = dma.done %s571, 128
        $region52: #{constraint_dynamic_embedding.1} parent=43 // pred_fallthru
          _
        // Predicated region
        $region53: #{constraint_dynamic_embedding.1} parent=43 // pred_check
          %p576 = pneg %p145
        $region54: #{constraint_dynamic_embedding.1} parent=43 // pred_check_branch
          %578 = sbr.rel (%p576) target = $region56
        $region55: #{constraint_dynamic_embedding.1} parent=43 // pred_region
          %s579 = sand.u32 %s23, 1
          %s580 = scalar_lea.sflag [#allocation5], %s579
          %s581 = sand.u32 %s130, 1
          %s582 = smul.addr %s581, 8
          %s583 = scalar_lea.vmem [#allocation6], %s582
          %584 = dma.done %s580, 128
        $region56: #{constraint_dynamic_embedding.1} parent=43 // pred_fallthru
          _
      $region44: #{constraint_dynamic_embedding.1} parent=5 // pred_fallthru
        _
    $region6: #{constraint_dynamic_embedding.1} parent=1 // loop_footer
      %s21 = sadd.s32 1, %s17
    $region7: #{constraint_dynamic_embedding.1} parent=1 // loop_footer_branch
      %16 = sbr.rel target = $region3
    $region8: #{constraint_dynamic_embedding.1} parent=1 // loop_exit
      _
    %585 = vsyncpa [#allocation3], 1
    %s586 = scalar_lea.sflag [#allocation3], 1
    %587 = vsyncpa %s586, 1
    %588 = vsyncpa [#allocation5], 1
    %s589 = scalar_lea.sflag [#allocation5], 1
    %590 = vsyncpa %s589, 1

</llo_original>
